<compile_context>
chip_gen: v5e
topology: v5e:2x2
jax: 0.10.0
libtpu: 0.0.40
codegen_flags: <defaults>
</compile_context>

<pallas_src>
import functools

import jax
import jax.numpy as jnp
from jax.experimental import pallas as pl
from jax.experimental.pallas import tpu as pltpu


def _round_up(x, m):
    return ((x + m - 1) // m) * m


_VMEM_LIMIT = 48 * 1024 * 1024      # fits v5e/v6e (128 MiB phys) and v7x (64 MiB phys)
_X2_TILE_BYTES = 8 * 1024 * 1024    # x2 streaming tile; 2x buffering -> 16 MiB
_X1_TILE_BYTES = 6 * 1024 * 1024    # x1/out tiles; 2x2 buffering -> ~24 MiB


def _pick_spatial_tile(hw, c, elem_bytes, t_hw=None):
    """Lane (spatial) tile for the x2 stream: multiple of 128, ~8 MiB, no
    divisibility requirement (ragged last tile is masked in-kernel)."""
    if t_hw is None:
        t_hw = max(128, _X2_TILE_BYTES // max(1, c * elem_bytes))
    t_hw = max(128, (t_hw // 128) * 128)
    t_hw = min(t_hw, _round_up(hw, 128))
    return t_hw


# ---------------------------------------------------------------------------
# Kernel 1: partial GAP over x2.
#   Grid (B, num_spatial_tiles); x2 block (C, t_hw); output block (C, 128)
#   resident across the spatial axis (accumulator).  Hot loop = VPU adds only.
# ---------------------------------------------------------------------------
def _gap_partial_kernel(x2_ref, acc_ref, *, hw, t_hw, ragged):
    s = pl.program_id(1)

    @pl.when(s == 0)
    def _init():
        acc_ref[...] = jnp.zeros_like(acc_ref)

    n_chunks = t_hw // 128
    if ragged:
        rem = hw - s * t_hw                                      # valid cols in this tile
        lane = jax.lax.broadcasted_iota(jnp.int32, (1, 128), 1)  # hoisted out of the loop

    def body(i, carry):
        off = pl.multiple_of(i * 128, 128)
        sl = x2_ref[:, pl.ds(off, 128)].astype(jnp.float32)      # (C, 128)
        if ragged:
            sl = jnp.where(off + lane < rem, sl, 0.0)            # mask padded/garbage cols
        acc_ref[...] += sl                                       # VPU add, lane-dense
        return carry

    unroll = 8 if n_chunks % 8 == 0 else (True if n_chunks <= 8 else 1)
    jax.lax.fori_loop(0, n_chunks, body, 0, unroll=unroll)


# ---------------------------------------------------------------------------
# Kernel 2: fused MLP over x1.  Grid (B, cdiv(L, t_l)).
#   fused = ReLU(x1_tile @ WmA^T + pb[b])
# ---------------------------------------------------------------------------
def _fused_mlp_kernel(x1_ref, pb_ref, wmat_ref, o_ref):
    y = jnp.dot(x1_ref[...], wmat_ref[...],
                preferred_element_type=jnp.float32)              # (t_l, C), native dtype MXU
    y = y + pb_ref[...]                                          # + (1, C) per-batch bias
    o_ref[...] = jnp.maximum(y, 0.0).astype(o_ref.dtype)
    # TODO(synk): nn.Dropout(0.1) is the identity in eval mode; training-mode
    # random masking is not implemented here.


def channel_attention_fusion(x1, x2, w1, b1, w2, b2, wm, bm,
                             *, t_hw=None, t_l=None):
    """Eval-mode forward of ChannelAttentionFusion.

    x1: (B, L, C)            x2: (B, C, H, W)
    w1: (C//4, C), b1: (C//4,)   -- ChannelAttention.fc[0]
    w2: (C, C//4), b2: (C,)      -- ChannelAttention.fc[2]
    wm: (C, 2C),   bm: (C,)      -- ChannelAttentionFusion.mlp[0]
    returns (B, L, C)
    """
    B, L, C = x1.shape
    Bx, Cx, H, W = x2.shape
    assert (B, C) == (Bx, Cx), "x1 / x2 batch or channel mismatch"
    C4 = w1.shape[0]
    assert w1.shape == (C4, C) and b1.shape == (C4,)
    assert w2.shape == (C, C4) and b2.shape == (C,)
    assert wm.shape == (C, 2 * C) and bm.shape == (C,)

    # ---- kernel 1: streamed partial GAP over x2 (no HBM pad/copy of x2) ----
    HW = H * W
    x2r = x2.reshape(B, C, HW)                    # trailing-dim reshape: free, no copy
    t_hw = _pick_spatial_tile(HW, C, x2.dtype.itemsize, t_hw)
    n_s = pl.cdiv(HW, t_hw)
    ragged = (HW % t_hw) != 0

    kernel1 = functools.partial(_gap_partial_kernel, hw=HW, t_hw=t_hw, ragged=ragged)
    cost1 = pl.CostEstimate(
        flops=int(B * C * _round_up(HW, 128)),
        transcendentals=0,
        bytes_accessed=int(B * C * HW * x2.dtype.itemsize + B * C * 128 * 4),
    )

    partial_sums = pl.pallas_call(
        kernel1,
        out_shape=jax.ShapeDtypeStruct((B, C, 128), jnp.float32),
        grid=(B, n_s),
        in_specs=[pl.BlockSpec((None, C, t_hw), lambda b, s: (b, 0, s))],   # x2 stream
        out_specs=pl.BlockSpec((None, C, 128), lambda b, s: (b, 0, 0)),     # resident acc
        compiler_params=pltpu.CompilerParams(
            dimension_semantics=("parallel", "arbitrary"),
            vmem_limit_bytes=_VMEM_LIMIT),
        cost_estimate=cost1,
    )(x2r)
    # TODO(synk): on v7x with tiny/odd batch, a second "parallel" split of the
    # spatial axis (two partial accumulators combined below) would keep both
    # TensorCores busy; not implemented here.

    # ---- tiny per-batch attention MLP + pooled-branch projection in JAX ----
    # O(B*C*C): negligible next to the x2 stream; keeps M=1/N=1 matmuls off
    # kernel 1's critical path and the final cross-lane reduce out of the hot loop.
    hi = jax.lax.Precision.HIGHEST
    gap = jnp.sum(partial_sums, axis=-1) * (1.0 / float(HW))        # (B, C) == mean(x2)
    h = jnp.maximum(jnp.dot(gap, w1.T, precision=hi) + b1, 0.0)     # (B, C//4)
    att = jax.nn.sigmoid(jnp.dot(h, w2.T, precision=hi) + b2)       # (B, C)
    pooled = gap * att                                              # == mean(x2 * att)
    pb = jnp.dot(pooled, wm[:, C:].T, precision=hi) + bm            # (B, C) per-batch bias
    pb_row = pb.reshape(B, 1, C).astype(jnp.float32)                # lane-dense row

    # ---- kernel 2: per-(batch, seq-tile) fused MLP over x1 (no pad/slice) ----
    if t_l is None:
        t_l = max(8, _X1_TILE_BYTES // max(1, C * x1.dtype.itemsize))
    t_l = max(8, (t_l // 8) * 8)
    t_l = min(t_l, 8192, _round_up(L, 8))
    n_l = pl.cdiv(L, t_l)

    wm_a_t = wm[:, :C].T.astype(x1.dtype)          # (C, C) x1-branch weight, dtype-native

    cost2 = pl.CostEstimate(
        flops=int(2 * B * L * C * C + 2 * B * L * C),
        transcendentals=0,
        bytes_accessed=int(x1.dtype.itemsize * (2 * B * L * C + C * C) + 4 * B * C),
    )

    fused = pl.pallas_call(
        _fused_mlp_kernel,
        out_shape=jax.ShapeDtypeStruct((B, L, C), x1.dtype),
        grid=(B, n_l),
        in_specs=[
            pl.BlockSpec((None, t_l, C), lambda b, l: (b, l, 0)),   # x1 tiles (ragged ok)
            pl.BlockSpec((None, 1, C), lambda b, l: (b, 0, 0)),     # per-batch bias row
            pl.BlockSpec((C, C), lambda b, l: (0, 0)),              # WmA^T (resident)
        ],
        out_specs=pl.BlockSpec((None, t_l, C), lambda b, l: (b, l, 0)),
        compiler_params=pltpu.CompilerParams(
            dimension_semantics=("parallel", "parallel"),
            vmem_limit_bytes=_VMEM_LIMIT),
        cost_estimate=cost2,
    )(x1, pb_row, wm_a_t)

    return fused


# ---------------------------------------------------------------------------
# Pure-JAX reference (mirrors the PyTorch forward, eval mode).
# ---------------------------------------------------------------------------
def channel_attention_fusion_ref(x1, x2, w1, b1, w2, b2, wm, bm):
    hi = jax.lax.Precision.HIGHEST
    B, C, H, W = x2.shape
    L = x1.shape[1]
    gap = jnp.mean(x2, axis=(2, 3))                                  # (B, C)
    h = jnp.maximum(jnp.dot(gap, w1.T, precision=hi) + b1, 0.0)
    att = jax.nn.sigmoid(jnp.dot(h, w2.T, precision=hi) + b2)        # (B, C)
    x2w = x2 * att[:, :, None, None]
    x2p = jnp.mean(x2w, axis=(2, 3))                                 # (B, C)
    x2e = jnp.broadcast_to(x2p[:, None, :], (B, L, C))
    fused_in = jnp.concatenate([x1, x2e], axis=-1)                   # (B, L, 2C)
    fused = jnp.maximum(
        jnp.einsum("blk,ok->blo", fused_in, wm, precision=hi) + bm, 0.0)
    return fused                                                     # dropout = identity


if __name__ == "__main__":
    def make_case(key, B, C, H, W, L):
        C4 = C // 4
        k1, k2, k3, k4, k5, k6 = jax.random.split(key, 6)
        x1 = jax.random.normal(k1, (B, L, C), dtype=jnp.float32)
        x2 = jax.random.normal(k2, (B, C, H, W), dtype=jnp.float32)
        # ChannelAttention params (kaiming_normal_ fan_out, zero bias).
        w1 = (2.0 / C4) ** 0.5 * jax.random.normal(k3, (C4, C), dtype=jnp.float32)
        b1 = jnp.zeros((C4,), dtype=jnp.float32)
        w2 = (2.0 / C) ** 0.5 * jax.random.normal(k4, (C, C4), dtype=jnp.float32)
        b2 = jnp.zeros((C,), dtype=jnp.float32)
        # Fusion MLP params.
        wm = (1.0 / (2 * C)) ** 0.5 * jax.random.normal(k5, (C, 2 * C), dtype=jnp.float32)
        bm = 0.05 * jax.random.normal(k6, (C,), dtype=jnp.float32)
        return (x1, x2, w1, b1, w2, b2, wm, bm)

    key = jax.random.PRNGKey(0)
    ka, kb = jax.random.split(key)

    # Case 1: even shapes; small tile overrides force 2 spatial grid steps and
    # 2 seq tiles (multi-step accumulator / multi-tile MLP paths).
    args = make_case(ka, B=2, C=128, H=16, W=16, L=64)
    out = jax.block_until_ready(channel_attention_fusion(*args, t_hw=128, t_l=32))
    ref = channel_attention_fusion_ref(*args)
    assert out.shape == ref.shape
    err = float(jnp.max(jnp.abs(out - ref)))
    assert jnp.allclose(out, ref, atol=1e-4, rtol=1e-4), f"case1 mismatch: {err}"

    # Case 2: ragged tiles — H*W=225 with 128-wide spatial tiles exercises the
    # in-kernel lane mask; L=50 with t_l=32 exercises ragged seq blocks
    # (no pad / no output slice).
    args = make_case(kb, B=2, C=128, H=15, W=15, L=50)
    out = jax.block_until_ready(channel_attention_fusion(*args, t_hw=128, t_l=32))
    ref = channel_attention_fusion_ref(*args)
    assert out.shape == ref.shape
    err = float(jnp.max(jnp.abs(out - ref)))
    assert jnp.allclose(out, ref, atol=1e-4, rtol=1e-4), f"case2 mismatch: {err}"

    # Case 3: default (large) tiles — single spatial step / single seq tile.
    args = make_case(ka, B=2, C=128, H=16, W=16, L=64)
    out = jax.block_until_ready(channel_attention_fusion(*args))
    ref = channel_attention_fusion_ref(*args)
    err = float(jnp.max(jnp.abs(out - ref)))
    assert jnp.allclose(out, ref, atol=1e-4, rtol=1e-4), f"case3 mismatch: {err}"

    print("KERNEL_OK")
</pallas_src>

<mosaic_0001>
module attributes {stable_mosaic.version = 11 : i64} {
  func.func @_gap_partial_kernel(%arg0: i32, %arg1: i32, %arg2: memref<1x128x128xf32, #tpu.memory_space<vmem>>, %arg3: memref<1x128x128xf32, #tpu.memory_space<vmem>>) attributes {dimension_semantics = [#tpu.dimension_semantics<parallel>, #tpu.dimension_semantics<arbitrary>], iteration_bounds = array<i64: 2, 2>, scalar_prefetch = 0 : i64, scratch_operands = 0 : i64, tpu.core_type = #tpu.core_type<tc>, window_params = [{transform_indices = @transform_0, window_bounds = array<i64: 1, 128, 128>}, {transform_indices = @transform_1, window_bounds = array<i64: 1, 128, 128>}]} {
    %c0_i32 = arith.constant 0 : i32
    %0 = arith.cmpi eq, %arg1, %c0_i32 : i32
    %1 = arith.extui %0 : i1 to i32
    %c0_i32_0 = arith.constant 0 : i32
    %2 = arith.cmpi ne, %1, %c0_i32_0 : i32
    scf.if %2 {
      %cst = arith.constant 0.000000e+00 : f32
      %14 = vector.broadcast %cst : f32 to vector<128x128xf32>
      %c0_9 = arith.constant 0 : index
      %c0_10 = arith.constant 0 : index
      %c0_11 = arith.constant 0 : index
      %15 = vector.load %arg3[%c0_9, %c0_10, %c0_11] : memref<1x128x128xf32, #tpu.memory_space<vmem>>, vector<1x128x128xf32>
      %16 = vector.shape_cast %15 : vector<1x128x128xf32> to vector<128x128xf32>
      %17 = vector.shape_cast %14 : vector<128x128xf32> to vector<1x128x128xf32>
      tpu.vector_store %arg3[%c0_9, %c0_10, %c0_11], %17 {strides = array<i32>} : memref<1x128x128xf32, #tpu.memory_space<vmem>>, vector<1x128x128xf32>,
    } else {
    }
    %c0_i32_1 = arith.constant 0 : i32
    %c128_i32 = arith.constant 128 : i32
    %3 = arith.muli %c0_i32_1, %c128_i32 : i32
    %4 = tpu.assume_multiple %3, 128 : i32
    %c0 = arith.constant 0 : index
    %c0_2 = arith.constant 0 : index
    %5 = arith.index_cast %4 : i32 to index
    %6 = vector.load %arg2[%c0, %c0_2, %5] : memref<1x128x128xf32, #tpu.memory_space<vmem>>, vector<1x128x128xf32>
    %7 = vector.shape_cast %6 : vector<1x128x128xf32> to vector<128x128xf32>
    %c0_3 = arith.constant 0 : index
    %c0_4 = arith.constant 0 : index
    %c0_5 = arith.constant 0 : index
    %8 = vector.load %arg3[%c0_3, %c0_4, %c0_5] : memref<1x128x128xf32, #tpu.memory_space<vmem>>, vector<1x128x128xf32>
    %9 = vector.shape_cast %8 : vector<1x128x128xf32> to vector<128x128xf32>
    %10 = arith.addf %9, %7 : vector<128x128xf32>
    %c0_6 = arith.constant 0 : index
    %c0_7 = arith.constant 0 : index
    %c0_8 = arith.constant 0 : index
    %11 = vector.load %arg3[%c0_6, %c0_7, %c0_8] : memref<1x128x128xf32, #tpu.memory_space<vmem>>, vector<1x128x128xf32>
    %12 = vector.shape_cast %11 : vector<1x128x128xf32> to vector<128x128xf32>
    %13 = vector.shape_cast %10 : vector<128x128xf32> to vector<1x128x128xf32>
    tpu.vector_store %arg3[%c0_6, %c0_7, %c0_8], %13 {strides = array<i32>} : memref<1x128x128xf32, #tpu.memory_space<vmem>>, vector<1x128x128xf32>,
    %c1_i32 = arith.constant 1 : i32
    return
  }
  func.func @transform_0(%arg0: i32, %arg1: i32) -> (i32, i32, i32) {
    %c0_i32 = arith.constant 0 : i32
    %c0_i32_0 = arith.constant 0 : i32
    return %arg0, %c0_i32, %arg1 : i32, i32, i32
  }
  func.func @transform_1(%arg0: i32, %arg1: i32) -> (i32, i32, i32) {
    %c0_i32 = arith.constant 0 : i32
    %c0_i32_0 = arith.constant 0 : i32
    %c0_i32_1 = arith.constant 0 : i32
    return %arg0, %c0_i32, %c0_i32_0 : i32, i32, i32
  }
}

</mosaic_0001>

<llo_original>
// kernel: tpu_custom_call.1
$region0: #{tpu_custom_call.1}
  #allocation0 [shape = 'u32[]', space=smem, size = 0x4, offset = 0x4, fixed_abs, tag = 'smem constant byte address 0x4 - core index']
  #allocation1 [shape = 'u32[72,128]{1,0:T(1,128)}', space=vmem, size = 0x9000, scoped, tag = 'internal scratch']
  %s0 = inlined_call_operand.hbm [shape: f32[2,128,256], index: 0, kind: input, shape index: {}]
  %s1 = inlined_call_operand.hbm [shape: f32[2,128,128], index: 1, kind: output, shape index: {}]
  %s2 = sld [smem:[#allocation0]]
  $region45: #{tpu_custom_call.1} parent=0
    _
  %s4 = ssub.s32 1, %s2
  %s5 = scalar_select 0, %s4, %s2
  $region1: #{tpu_custom_call.1} parent=0
    #allocation2 [shape = 'u8[131072]{0}', space=vmem, size = 0x20000, scoped, tag = 'input window, operand 0']
    #allocation3 [shape = 's32[2]{0}', space=sflag, size = 0x8, scoped, tag = 'scoped memory for tpu_custom_call.1']
    #allocation4 [shape = 's32[2]{0}', space=sflag, size = 0x8, scoped, tag = 'scoped memory for tpu_custom_call.1']
    #allocation5 [shape = 'u8[131072]{0}', space=vmem, size = 0x20000, scoped, tag = 'output window, operand 0']
    %6 = vsyncpa [#allocation3], 0
    %s7 = scalar_lea.sflag [#allocation3], 1
    %8 = vsyncpa %s7, 0
    %9 = vsyncpa [#allocation4], 0
    %s10 = scalar_lea.sflag [#allocation4], 1
    %11 = vsyncpa %s10, 0
    loop: start=0, step=1, limit=6
    $region2: #{tpu_custom_call.1} parent=1 // loop_pre_header
      _
    $region3: #{tpu_custom_call.1} parent=1 // loop_header
      %s13 = sphi 0, %s17
      %p14 = scmp.ge.s32.totalorder %s13, 6
      %s20 = sphi 0, %s32
      %s21 = sphi 0, %s28
      %s22 = sphi 0, %s20
      %s23 = sphi 0, %s21
      %s24 = sphi 0, %s22
      %s25 = sphi 0, %s23
      %s37 = sphi 0, %s39
      %s40 = sphi 0, %s37
      %s41 = sphi 0, %s40
      %s57 = sphi 0, %s41
      %s63 = sphi 0, %s65
      %s66 = sphi 0, %s63
      %s67 = sphi 0, %s66
      %s83 = sphi 0, %s67
    $region4: #{tpu_custom_call.1} parent=1 // loop_header_branch
      %16 = sbr.rel (%p14) target = $region8
    $region5: #{tpu_custom_call.1} parent=1 // loop_body
      %s18 = ssub.s32 %s13, 1
      %s19 = ssub.s32 %s13, 2
      %s26 = sadd.s32 1, %s21
      %p27 = scmp.ge.s32.totalorder %s26, 2
      %s28 = scalar_select %p27, 0, %s26
      %s29 = sadd.s32 1, %s20
      %s30 = scalar_select %p27, %s29, %s20
      %p31 = scmp.ge.s32.totalorder %s30, 2
      %s32 = scalar_select %p31, 0, %s30
      %s33 = ssub.s32 %s20, %s32
      %s34 = ssub.s32 %s21, %s28
      %s35 = sor.u32 %s33, %s34
      %p36 = scmp.eq.s32.totalorder %s35, 0
      %s38 = sadd.s32 %s37, 1
      %s39 = scalar_select %p36, %s37, %s38
      %p42 = pneg %p36
      %p43 = scmp.eq.s32.totalorder %s13, 3
      %p44 = por %p42, %p43
      %p45 = scmp.ne.s32.totalorder %s37, %s40
      %p46 = scmp.eq.s32.totalorder %s13, 0
      %p47 = por %p45, %p46
      %p48 = scmp.ne.s32.totalorder %s37, %s40
      %p49 = scmp.eq.s32.totalorder %s18, 3
      %p50 = por %p48, %p49
      %p51 = scmp.ne.s32.totalorder %s40, %s41
      %p52 = scmp.eq.s32.totalorder %s18, 0
      %p53 = por %p51, %p52
      %p54 = scmp.ne.s32.totalorder %s40, %s41
      %p55 = scmp.eq.s32.totalorder %s19, 3
      %p56 = por %p54, %p55
      %p58 = scmp.ne.s32.totalorder %s41, %s57
      %p59 = scmp.eq.s32.totalorder %s19, 0
      %p60 = por %p58, %p59
      %s61 = ssub.s32 %s20, %s32
      %p62 = scmp.eq.s32.totalorder %s61, 0
      %s64 = sadd.s32 %s63, 1
      %s65 = scalar_select %p62, %s63, %s64
      %p68 = pneg %p62
      %p69 = scmp.eq.s32.totalorder %s13, 3
      %p70 = por %p68, %p69
      %p71 = scmp.ne.s32.totalorder %s63, %s66
      %p72 = scmp.eq.s32.totalorder %s13, 0
      %p73 = por %p71, %p72
      %p74 = scmp.ne.s32.totalorder %s63, %s66
      %p75 = scmp.eq.s32.totalorder %s18, 3
      %p76 = por %p74, %p75
      %p77 = scmp.ne.s32.totalorder %s66, %s67
      %p78 = scmp.eq.s32.totalorder %s18, 0
      %p79 = por %p77, %p78
      %p80 = scmp.ne.s32.totalorder %s66, %s67
      %p81 = scmp.eq.s32.totalorder %s19, 3
      %p82 = por %p80, %p81
      %p84 = scmp.ne.s32.totalorder %s67, %s83
      %p85 = scmp.eq.s32.totalorder %s19, 0
      %p86 = por %p84, %p85
      %p87 = scmp.le.s32.totalorder 1, %s13
      %p88 = scmp.lt.s32.totalorder %s13, 5
      %p89 = pnand %p87, %p88
      %p90 = pneg %p89
      // Predicated region
      $region9: #{tpu_custom_call.1} parent=5 // pred_check
        _
      $region10: #{tpu_custom_call.1} parent=5 // pred_check_branch
        %92 = sbr.rel (%p89) target = $region12
      $region11: #{tpu_custom_call.1} parent=5 // pred_region
        %s93 = ssub.s32 %s13, 1
      $region12: #{tpu_custom_call.1} parent=5 // pred_fallthru
        _
      %p94 = scmp.lt.s32.totalorder %s13, 4
      // Predicated region
      $region13: #{tpu_custom_call.1} parent=5 // pred_check
        %p95 = pneg %p94
      $region14: #{tpu_custom_call.1} parent=5 // pred_check_branch
        %97 = sbr.rel (%p95) target = $region16
      $region15: #{tpu_custom_call.1} parent=5 // pred_region
        // Predicated region
        $region17: #{tpu_custom_call.1} parent=15 // pred_check
          %p98 = pneg %p47
        $region18: #{tpu_custom_call.1} parent=15 // pred_check_branch
          %100 = sbr.rel (%p98) target = $region20
        $region19: #{tpu_custom_call.1} parent=15 // pred_region
          %s101 = sand.u32 %s37, 1
          %s102 = scalar_lea.sflag [#allocation3], %s101
          %s103 = sand.u32 %s37, 1
          %s104 = smul.addr %s103, 128
          %s105 = scalar_lea.vmem [#allocation2], %s104
          %107 = vsyncadd %s102, 0
          %s108 = smul.addr %s20, 32
          %s109 = sadd.s32 %s21, %s108
          %s110 = smul.addr %s109, 8
          %s111 = scalar_lea.hbm %s0, %s110
          %s112 = sshll.u32 %s111, 4
          %s113 = int_to_ptr.hbm [resolvable:$true] %s112
          %s114 = sshll.u32 %s105, 4
          %s115 = int_to_ptr.vmem [resolvable:$true] %s114
          %120 = dma.hbm_to_vmem [thread:$0]  %s113, 2048, %s115, %s102, 256, 128, 8
        $region20: #{tpu_custom_call.1} parent=15 // pred_fallthru
          _
      $region16: #{tpu_custom_call.1} parent=5 // pred_fallthru
        _
      %p121 = scmp.le.s32.totalorder 1, %s13
      %p122 = scmp.lt.s32.totalorder %s13, 5
      %p123 = pnand %p121, %p122
      %p124 = pneg %p123
      // Predicated region
      $region21: #{tpu_custom_call.1} parent=5 // pred_check
        _
      $region22: #{tpu_custom_call.1} parent=5 // pred_check_branch
        %126 = sbr.rel (%p123) target = $region24
      $region23: #{tpu_custom_call.1} parent=5 // pred_region
        %s127 = ssub.s32 %s13, 1
        %s128 = sand.u32 %s40, 1
        %s129 = scalar_lea.sflag [#allocation3], %s128
        %s130 = sand.u32 %s40, 1
        %s131 = smul.addr %s130, 128
        %s132 = scalar_lea.vmem [#allocation2], %s131
        // Predicated region
        $region25: #{tpu_custom_call.1} parent=23 // pred_check
          %p133 = pneg %p53
        $region26: #{tpu_custom_call.1} parent=23 // pred_check_branch
          %135 = sbr.rel (%p133) target = $region28
        $region27: #{tpu_custom_call.1} parent=23 // pred_region
          %137 = dma.done %s129, 2048
        $region28: #{tpu_custom_call.1} parent=23 // pred_fallthru
          _
        %s138 = sand.u32 %s40, 1
        %s139 = scalar_lea.sflag [#allocation3], %s138
        %s140 = sand.u32 %s40, 1
        %s141 = smul.addr %s140, 128
        %s142 = scalar_lea.vmem [#allocation2], %s141
        %p143 = pneg %p53
        %p144 = pneg %p50
        %p145 = pneg %p79
        %p146 = pneg %p76
        %s147 = sand.u32 %s66, 1
        %s148 = scalar_lea.sflag [#allocation4], %s147
        %s149 = sand.u32 %s66, 1
        %s150 = smul.addr %s149, 128
        %s151 = scalar_lea.vmem [#allocation5], %s150
        %p152 = scmp.eq.s32.totalorder %s23, 0
        // Predicated region
        $region29: #{tpu_custom_call.1} parent=23 // pred_check
          %p153 = pneg %p152
        $region30: #{tpu_custom_call.1} parent=23 // pred_check_branch
          %155 = sbr.rel (%p153) target = $region32
        $region31: #{tpu_custom_call.1} parent=23 // pred_region
          %156 = vst [vmem:[%s151] sm:$0xff] 0.0
          %157 = vst [vmem:[%s151 + $0x8] sm:$0xff] 0.0
          %158 = vst [vmem:[%s151 + $0x10] sm:$0xff] 0.0
          %159 = vst [vmem:[%s151 + $0x18] sm:$0xff] 0.0
          %160 = vst [vmem:[%s151 + $0x20] sm:$0xff] 0.0
          %161 = vst [vmem:[%s151 + $0x28] sm:$0xff] 0.0
          %162 = vst [vmem:[%s151 + $0x30] sm:$0xff] 0.0
          %163 = vst [vmem:[%s151 + $0x38] sm:$0xff] 0.0
          %164 = vst [vmem:[%s151 + $0x40] sm:$0xff] 0.0
          %165 = vst [vmem:[%s151 + $0x48] sm:$0xff] 0.0
          %166 = vst [vmem:[%s151 + $0x50] sm:$0xff] 0.0
          %167 = vst [vmem:[%s151 + $0x58] sm:$0xff] 0.0
          %168 = vst [vmem:[%s151 + $0x60] sm:$0xff] 0.0
          %169 = vst [vmem:[%s151 + $0x68] sm:$0xff] 0.0
          %170 = vst [vmem:[%s151 + $0x70] sm:$0xff] 0.0
          %171 = vst [vmem:[%s151 + $0x78] sm:$0xff] 0.0
        $region32: #{tpu_custom_call.1} parent=23 // pred_fallthru
          _
        %v172 = vld [vmem:[%s132] sm:$0xff]
        %v173 = vld [vmem:[%s132 + $0x8] sm:$0xff]
        %v174 = vld [vmem:[%s132 + $0x10] sm:$0xff]
        %v175 = vld [vmem:[%s132 + $0x18] sm:$0xff]
        %v176 = vld [vmem:[%s132 + $0x20] sm:$0xff]
        %v177 = vld [vmem:[%s132 + $0x28] sm:$0xff]
        %v178 = vld [vmem:[%s132 + $0x30] sm:$0xff]
        %v179 = vld [vmem:[%s132 + $0x38] sm:$0xff]
        %v180 = vld [vmem:[%s132 + $0x40] sm:$0xff]
        %v181 = vld [vmem:[%s132 + $0x48] sm:$0xff]
        %v182 = vld [vmem:[%s132 + $0x50] sm:$0xff]
        %v183 = vld [vmem:[%s132 + $0x58] sm:$0xff]
        %v184 = vld [vmem:[%s132 + $0x60] sm:$0xff]
        %v185 = vld [vmem:[%s132 + $0x68] sm:$0xff]
        %v186 = vld [vmem:[%s132 + $0x70] sm:$0xff]
        %v187 = vld [vmem:[%s132 + $0x78] sm:$0xff]
        %v188 = vld [vmem:[%s151] sm:$0xff]
        %v189 = vld [vmem:[%s151 + $0x8] sm:$0xff]
        %v190 = vld [vmem:[%s151 + $0x10] sm:$0xff]
        %v191 = vld [vmem:[%s151 + $0x18] sm:$0xff]
        %v192 = vld [vmem:[%s151 + $0x20] sm:$0xff]
        %v193 = vld [vmem:[%s151 + $0x28] sm:$0xff]
        %v194 = vld [vmem:[%s151 + $0x30] sm:$0xff]
        %v195 = vld [vmem:[%s151 + $0x38] sm:$0xff]
        %v196 = vld [vmem:[%s151 + $0x40] sm:$0xff]
        %v197 = vld [vmem:[%s151 + $0x48] sm:$0xff]
        %v198 = vld [vmem:[%s151 + $0x50] sm:$0xff]
        %v199 = vld [vmem:[%s151 + $0x58] sm:$0xff]
        %v200 = vld [vmem:[%s151 + $0x60] sm:$0xff]
        %v201 = vld [vmem:[%s151 + $0x68] sm:$0xff]
        %v202 = vld [vmem:[%s151 + $0x70] sm:$0xff]
        %v203 = vld [vmem:[%s151 + $0x78] sm:$0xff]
        %v204 = vadd.f32 %v188, %v172
        %v205 = vadd.f32 %v189, %v173
        %v206 = vadd.f32 %v190, %v174
        %v207 = vadd.f32 %v191, %v175
        %v208 = vadd.f32 %v192, %v176
        %v209 = vadd.f32 %v193, %v177
        %v210 = vadd.f32 %v194, %v178
        %v211 = vadd.f32 %v195, %v179
        %v212 = vadd.f32 %v196, %v180
        %v213 = vadd.f32 %v197, %v181
        %v214 = vadd.f32 %v198, %v182
        %v215 = vadd.f32 %v199, %v183
        %v216 = vadd.f32 %v200, %v184
        %v217 = vadd.f32 %v201, %v185
        %v218 = vadd.f32 %v202, %v186
        %v219 = vadd.f32 %v203, %v187
        %220 = vst [vmem:[%s151] sm:$0xff] %v204
        %221 = vst [vmem:[%s151 + $0x8] sm:$0xff] %v205
        %222 = vst [vmem:[%s151 + $0x10] sm:$0xff] %v206
        %223 = vst [vmem:[%s151 + $0x18] sm:$0xff] %v207
        %224 = vst [vmem:[%s151 + $0x20] sm:$0xff] %v208
        %225 = vst [vmem:[%s151 + $0x28] sm:$0xff] %v209
        %226 = vst [vmem:[%s151 + $0x30] sm:$0xff] %v210
        %227 = vst [vmem:[%s151 + $0x38] sm:$0xff] %v211
        %228 = vst [vmem:[%s151 + $0x40] sm:$0xff] %v212
        %229 = vst [vmem:[%s151 + $0x48] sm:$0xff] %v213
        %230 = vst [vmem:[%s151 + $0x50] sm:$0xff] %v214
        %231 = vst [vmem:[%s151 + $0x58] sm:$0xff] %v215
        %232 = vst [vmem:[%s151 + $0x60] sm:$0xff] %v216
        %233 = vst [vmem:[%s151 + $0x68] sm:$0xff] %v217
        %234 = vst [vmem:[%s151 + $0x70] sm:$0xff] %v218
        %235 = vst [vmem:[%s151 + $0x78] sm:$0xff] %v219
        %s236 = sand.u32 %s66, 1
        %s237 = scalar_lea.sflag [#allocation4], %s236
        %s238 = sand.u32 %s66, 1
        %s239 = smul.addr %s238, 128
        %s240 = scalar_lea.vmem [#allocation5], %s239
        // Predicated region
        $region33: #{tpu_custom_call.1} parent=23 // pred_check
          %p241 = pneg %p76
        $region34: #{tpu_custom_call.1} parent=23 // pred_check_branch
          %243 = sbr.rel (%p241) target = $region36
        $region35: #{tpu_custom_call.1} parent=23 // pred_region
          %245 = vsyncadd %s237, 0
          %s246 = smul.addr %s22, 16
          %s247 = smul.addr %s246, 8
          %s248 = scalar_lea.hbm %s1, %s247
          %s249 = sshll.u32 %s240, 4
          %s250 = int_to_ptr.vmem [resolvable:$true] %s249
          %s251 = sshll.u32 %s248, 4
          %s252 = int_to_ptr.hbm [resolvable:$true] %s251
          %257 = dma.vmem_to_hbm [thread:$0]  %s250, 2048, %s252, %s237, 128, 128, 8
        $region36: #{tpu_custom_call.1} parent=23 // pred_fallthru
          _
      $region24: #{tpu_custom_call.1} parent=5 // pred_fallthru
        _
      %p258 = scmp.le.s32.totalorder 2, %s13
      // Predicated region
      $region37: #{tpu_custom_call.1} parent=5 // pred_check
        %p259 = pneg %p258
      $region38: #{tpu_custom_call.1} parent=5 // pred_check_branch
        %261 = sbr.rel (%p259) target = $region40
      $region39: #{tpu_custom_call.1} parent=5 // pred_region
        %s262 = ssub.s32 %s13, 2
        // Predicated region
        $region41: #{tpu_custom_call.1} parent=39 // pred_check
          %p263 = pneg %p82
        $region42: #{tpu_custom_call.1} parent=39 // pred_check_branch
          %265 = sbr.rel (%p263) target = $region44
        $region43: #{tpu_custom_call.1} parent=39 // pred_region
          %s266 = sand.u32 %s67, 1
          %s267 = scalar_lea.sflag [#allocation4], %s266
          %s268 = sand.u32 %s67, 1
          %s269 = smul.addr %s268, 128
          %s270 = scalar_lea.vmem [#allocation5], %s269
          %272 = dma.done %s267, 2048
        $region44: #{tpu_custom_call.1} parent=39 // pred_fallthru
          _
      $region40: #{tpu_custom_call.1} parent=5 // pred_fallthru
        _
    $region6: #{tpu_custom_call.1} parent=1 // loop_footer
      %s17 = sadd.s32 1, %s13
    $region7: #{tpu_custom_call.1} parent=1 // loop_footer_branch
      %12 = sbr.rel target = $region3
    $region8: #{tpu_custom_call.1} parent=1 // loop_exit
      _
    %273 = vsyncpa [#allocation3], 1
    %s274 = scalar_lea.sflag [#allocation3], 1
    %275 = vsyncpa %s274, 1
    %276 = vsyncpa [#allocation4], 1
    %s277 = scalar_lea.sflag [#allocation4], 1
    %278 = vsyncpa %s277, 1

</llo_original>
